<compile_context>
chip_gen: v7x
topology: tpu7x:2x2x1
jax: 0.10.0
libtpu: 0.0.40
codegen_flags: <defaults>
</compile_context>

<pallas_src>
import math

import jax
import jax.numpy as jnp
from jax.experimental import pallas as pl
from jax.experimental.pallas import tpu as pltpu

_HALF_LOG_2PI = 0.5 * math.log(2.0 * math.pi)
_LANE = 128
_SUBLANE = 8


def _round_up(x, m):
    return ((x + m - 1) // m) * m


def _objective_kernel(scal_ref, xaug_ref, crossw_ref, postw_ref, prior_ref,
                      targ_ref, out_ref):
    # scalars (SMEM): [-0.5/ls^2, outputscale, outputscale+noise,
    #                  prior log-normalizer + (-P-T)*0.5*log(2*pi)]
    neg_half_inv_ls2 = scal_ref[0]
    outputscale = scal_ref[1]
    var_base = scal_ref[2]
    log_const = scal_ref[3]

    P = xaug_ref.shape[0] - 1          # params per candidate (last row is the ones row)
    Tp = targ_ref.shape[0]             # padded number of targets (sublane-aligned)

    x_aug = xaug_ref[...]              # (P+1, Bt)  candidates on lanes, ones row appended
    x = x_aug[:P, :]                   # (P,   Bt)

    # ---- squared distance via ONE fused MXU matmul -------------------------
    # crossw = [-2*x_train | ||x_train||^2] -> crossw @ [x; 1] = xt_sq - 2 * x_train.x
    cross = jnp.dot(crossw_ref[...], x_aug,
                    preferred_element_type=jnp.float32)              # (Np, Bt)
    x_sq = jnp.sum(x * x, axis=0, keepdims=True)                     # (1, Bt)
    sqdist = jnp.maximum(cross + x_sq, 0.0)
    k_star = outputscale * jnp.exp(neg_half_inv_ls2 * sqdist)        # (Np, Bt)

    # ---- fused posterior matmul: [alpha^T ; K^-1^T] @ k_star ---------------
    # (padded alpha/K^-1 rows & cols are zero, so padded training rows contribute nothing)
    mt = jnp.dot(postw_ref[...], k_star,
                 preferred_element_type=jnp.float32)                 # (Tp+Np, Bt)
    mean = mt[:Tp, :]                                                 # (Tp, Bt)
    tmp = mt[Tp:, :]                                                  # (Np, Bt)
    q = jnp.sum(tmp * k_star, axis=0, keepdims=True)                  # (1, Bt)
    var = jnp.maximum(var_base - q, 1e-6)                             # (1, Bt)

    # ---- data log-prob: rsqrt/log on EUP (no sqrt + divide) ----------------
    tp = targ_ref[...]                                                # (Tp, 3)
    expv = tp[:, 0:1]                                                 # (Tp, 1)
    uncv_sq = tp[:, 1:2]                                              # (Tp, 1)
    tmask = tp[:, 2:3]                                                # (Tp, 1) 1=real, 0=pad
    s2 = uncv_sq + var * var                                          # (Tp, Bt) = comb^2
    z_o = (mean - expv) * jax.lax.rsqrt(s2)
    objective = jnp.sum(tmask * (-0.5) * (z_o * z_o + jnp.log(s2)),
                        axis=0, keepdims=True)                        # (1, Bt)

    # ---- prior log-prob (normalizer hoisted into log_const) ----------------
    pp = prior_ref[...]                                               # (P, 2)
    flatp = pp[:, 0:1]
    inv_ps = pp[:, 1:2]                                               # 1/(prior_width*flatp)
    z_p = (x - flatp) * inv_ps                                        # (P, Bt)
    prior = -0.5 * jnp.sum(z_p * z_p, axis=0, keepdims=True)          # (1, Bt)

    out_ref[...] = -(prior + objective + log_const)                   # (1, Bt)


def make_constrained_gaussian_objective(flat_parameters, x_train, alpha, kinv,
                                        experimental_values, uncertainty_values,
                                        prior_width, lengthscale=1.0,
                                        outputscale=1.0, noise=0.01,
                                        max_tile=1024):
    """One-time setup of the surrogate/prior constants.

    Returns a jitted `objective(parameters)` with parameters (P,) or (B, P),
    producing a scalar / (B,) negative log-posterior. All parameter-independent
    work is done here (NOT per objective evaluation).
    """
    assert max_tile % _LANE == 0 and max_tile >= _LANE

    flatp = jnp.asarray(flat_parameters, jnp.float32).reshape(-1)
    P = flatp.shape[0]
    x_train = jnp.asarray(x_train, jnp.float32)                      # (N, P)
    assert x_train.shape[1] == P
    alpha = jnp.asarray(alpha, jnp.float32)                          # (N, T)
    kinv = jnp.asarray(kinv, jnp.float32)                            # (N, N)
    expv = jnp.asarray(experimental_values, jnp.float32).reshape(-1)  # (T,)
    uncv = jnp.asarray(uncertainty_values, jnp.float32).reshape(-1)   # (T,)
    N = x_train.shape[0]
    T = expv.shape[0]

    # --- sublane-align N and T once so the in-kernel mt[:Tp]/mt[Tp:] split is
    #     vreg-aligned; padded rows/cols are zeroed (and targets masked) so they
    #     contribute nothing. ---------------------------------------------------
    Np = _round_up(N, _SUBLANE)
    Tp = _round_up(T, _SUBLANE)

    xt_p = jnp.zeros((Np, P), jnp.float32).at[:N].set(x_train)
    xt_sq = jnp.sum(xt_p * xt_p, axis=1, keepdims=True)              # (Np, 1)
    cross_w = jnp.concatenate([-2.0 * xt_p, xt_sq], axis=1)          # (Np, P+1)

    alpha_p = jnp.zeros((Np, Tp), jnp.float32).at[:N, :T].set(alpha)
    kinv_p = jnp.zeros((Np, Np), jnp.float32).at[:N, :N].set(kinv)
    post_wT = jnp.concatenate([alpha_p.T, kinv_p.T], axis=0)         # (Tp+Np, Np)

    # NOTE: assumes strictly positive flat_parameters (same as the torch module).
    prior_scale = prior_width * flatp
    prior_pack = jnp.stack([flatp, 1.0 / prior_scale], axis=1)       # (P, 2)

    expv_p = jnp.zeros((Tp,), jnp.float32).at[:T].set(expv)
    uncsq_p = jnp.ones((Tp,), jnp.float32).at[:T].set(uncv * uncv)
    mask_p = jnp.zeros((Tp,), jnp.float32).at[:T].set(1.0)
    targ_pack = jnp.stack([expv_p, uncsq_p, mask_p], axis=1)         # (Tp, 3)

    # prior normalizer + both Gaussian -0.5*log(2*pi) constants, folded into one scalar
    log_const = (-jnp.sum(jnp.log(prior_scale))
                 - P * _HALF_LOG_2PI - T * _HALF_LOG_2PI)

    scal = jnp.stack([
        jnp.float32(-0.5 / (lengthscale * lengthscale)),
        jnp.float32(outputscale),
        jnp.float32(outputscale + noise),
        log_const.astype(jnp.float32),
    ])                                                                # (4,)

    @jax.jit
    def objective(parameters):
        parameters = jnp.asarray(parameters, jnp.float32)
        single = parameters.ndim == 1
        params = jnp.atleast_2d(parameters)                          # (B, P)
        B = params.shape[0]

        # --- tile selection (review rule): one wide tile when possible -------
        Bt = min(_round_up(B, _LANE), max_tile)
        Bp = _round_up(B, Bt)
        steps = Bp // Bt
        # v7x megacore parity: keep step count even whenever B spans >1 tile
        if steps > 1 and steps % 2:
            steps += 1
            Bp = steps * Bt

        params_pad = jnp.pad(params, ((0, Bp - B), (0, 0)), mode="edge")
        x_aug = jnp.concatenate([params_pad.T,
                                 jnp.ones((1, Bp), jnp.float32)], axis=0)  # (P+1, Bp)

        out = pl.pallas_call(
            _objective_kernel,
            out_shape=jax.ShapeDtypeStruct((1, Bp), jnp.float32),
            grid_spec=pltpu.PrefetchScalarGridSpec(
                num_scalar_prefetch=0,
                grid=(steps,),
                in_specs=[
                    pl.BlockSpec(memory_space=pltpu.MemorySpace.SMEM),   # scal
                    pl.BlockSpec((P + 1, Bt), lambda i: (0, i)),         # x_aug (batched)
                    # grid-invariant weights: constant block index -> fetched once
                    pl.BlockSpec((Np, P + 1), lambda i: (0, 0)),         # cross_w
                    pl.BlockSpec((Tp + Np, Np), lambda i: (0, 0)),       # post_wT
                    pl.BlockSpec((P, 2), lambda i: (0, 0)),              # prior_pack
                    pl.BlockSpec((Tp, 3), lambda i: (0, 0)),             # targ_pack
                ],
                out_specs=pl.BlockSpec((1, Bt), lambda i: (0, i)),       # lane-dense output
            ),
            compiler_params=pltpu.CompilerParams(
                dimension_semantics=("parallel",)),
        )(scal, x_aug, cross_w, post_wT, prior_pack, targ_pack)

        res = out[0, :B]                                              # stays on device
        return res[0] if single else res

    return objective


def _reference(params_batch, flat_parameters, x_train, alpha, kinv,
               experimental_values, uncertainty_values, prior_width,
               lengthscale=1.0, outputscale=1.0, noise=0.01):
    """Pure-JAX per-row mirror of the module math (direct squared distance)."""
    x = jnp.atleast_2d(jnp.asarray(params_batch, jnp.float32))        # (B, P)
    flatp = jnp.asarray(flat_parameters, jnp.float32).reshape(1, -1)
    d = x[:, None, :] - x_train[None, :, :]                           # (B, N, P)
    sqdist = jnp.sum(d * d, axis=-1)                                  # (B, N)
    k_star = outputscale * jnp.exp(-0.5 * sqdist / lengthscale ** 2)
    mean = k_star @ alpha                                             # (B, T)
    q = jnp.sum((k_star @ kinv) * k_star, axis=-1, keepdims=True)     # (B, 1)
    var = jnp.maximum(outputscale + noise - q, 1e-6)
    comb = jnp.sqrt(uncertainty_values.reshape(1, -1) ** 2 + var ** 2)  # (B, T)

    def logprob(val, loc, scale):
        z = (val - loc) / scale
        return -0.5 * z * z - jnp.log(scale) - _HALF_LOG_2PI

    prior = jnp.sum(logprob(x, flatp, prior_width * flatp), axis=-1)
    objective = jnp.sum(
        logprob(mean, experimental_values.reshape(1, -1), comb), axis=-1)
    return -(prior + objective)                                       # (B,)


if __name__ == "__main__":
    key = jax.random.PRNGKey(0)
    (kp, kx, ka, kk, ke, ku, kd,
     kx2, ka2, kk2, ke2, ku2) = jax.random.split(key, 12)

    # ---- config A: vreg-aligned surrogate sizes; B=300 runs one 384-lane step ----
    P = 8     # flattened LJ parameters (4 keys x [epsilon, rmin_half])
    T = 8     # number of target properties
    N = 16    # synthetic GP training points
    B = 300   # batch of candidate parameter sets

    flat_parameters = jnp.abs(jax.random.normal(kp, (P,), jnp.float32)) + 0.5
    parameters = flat_parameters[None, :] * (
        1.0 + 0.05 * jax.random.normal(kd, (B, P), jnp.float32))

    x_train = jax.random.normal(kx, (N, P), jnp.float32)
    alpha = 0.1 * jax.random.normal(ka, (N, T), jnp.float32)
    a = 0.05 * jax.random.normal(kk, (N, N), jnp.float32)
    kinv = 0.02 * jnp.eye(N, dtype=jnp.float32) + (a @ a.T) / N        # small PSD

    experimental_values = jax.random.normal(ke, (T,), jnp.float32)
    uncertainty_values = jnp.abs(jax.random.normal(ku, (T,), jnp.float32)) * 0.1 + 0.05
    prior_width = 0.1

    objective_a = make_constrained_gaussian_objective(
        flat_parameters, x_train, alpha, kinv, experimental_values,
        uncertainty_values, prior_width)

    result = jax.block_until_ready(objective_a(parameters))
    ref = _reference(parameters, flat_parameters, x_train, alpha, kinv,
                     experimental_values, uncertainty_values, prior_width)
    assert result.shape == (B,)
    assert jnp.allclose(result, ref, rtol=1e-3, atol=1e-3), (result[:4], ref[:4])

    # single-candidate path (original module's forward signature): scalar result
    single = jax.block_until_ready(objective_a(parameters[0]))
    assert single.shape == ()
    assert jnp.allclose(single, ref[0], rtol=1e-3, atol=1e-3), (single, ref[0])

    # ---- config B: non-aligned N/T (exercises the factory padding + target mask)
    #      with max_tile=128 to force a multi-step grid: 300 -> 3 steps -> bumped
    #      to 4 steps / Bp=512 for v7x megacore parity. -----------------------------
    T2, N2 = 7, 13
    x_train2 = jax.random.normal(kx2, (N2, P), jnp.float32)
    alpha2 = 0.1 * jax.random.normal(ka2, (N2, T2), jnp.float32)
    a2 = 0.05 * jax.random.normal(kk2, (N2, N2), jnp.float32)
    kinv2 = 0.02 * jnp.eye(N2, dtype=jnp.float32) + (a2 @ a2.T) / N2
    experimental_values2 = jax.random.normal(ke2, (T2,), jnp.float32)
    uncertainty_values2 = jnp.abs(jax.random.normal(ku2, (T2,), jnp.float32)) * 0.1 + 0.05

    objective_b = make_constrained_gaussian_objective(
        flat_parameters, x_train2, alpha2, kinv2, experimental_values2,
        uncertainty_values2, prior_width, max_tile=128)

    result2 = jax.block_until_ready(objective_b(parameters))
    ref2 = _reference(parameters, flat_parameters, x_train2, alpha2, kinv2,
                      experimental_values2, uncertainty_values2, prior_width)
    assert result2.shape == (B,)
    assert jnp.allclose(result2, ref2, rtol=1e-3, atol=1e-3), (result2[:4], ref2[:4])

    print("KERNEL_OK")
</pallas_src>

<mosaic_0001>
module attributes {stable_mosaic.version = 11 : i64} {
  func.func @_objective_kernel(%arg0: i32, %arg1: memref<4xf32, #tpu.memory_space<smem>>, %arg2: memref<9x384xf32, #tpu.memory_space<vmem>>, %arg3: memref<16x9xf32, #tpu.memory_space<vmem>>, %arg4: memref<24x16xf32, #tpu.memory_space<vmem>>, %arg5: memref<8x2xf32, #tpu.memory_space<vmem>>, %arg6: memref<8x3xf32, #tpu.memory_space<vmem>>, %arg7: memref<1x384xf32, #tpu.memory_space<vmem>>) attributes {dimension_semantics = [#tpu.dimension_semantics<parallel>], iteration_bounds = array<i64: 1>, scalar_prefetch = 0 : i64, scratch_operands = 0 : i64, tpu.core_type = #tpu.core_type<tc>, window_params = [{transform_indices = @transform_0, window_bounds = array<i64: 4>}, {transform_indices = @transform_1, window_bounds = array<i64: 9, 384>}, {pipeline_mode = #tpu.pipeline_mode<synchronous>, transform_indices = @transform_2, window_bounds = array<i64: 16, 9>}, {pipeline_mode = #tpu.pipeline_mode<synchronous>, transform_indices = @transform_3, window_bounds = array<i64: 24, 16>}, {pipeline_mode = #tpu.pipeline_mode<synchronous>, transform_indices = @transform_4, window_bounds = array<i64: 8, 2>}, {pipeline_mode = #tpu.pipeline_mode<synchronous>, transform_indices = @transform_5, window_bounds = array<i64: 8, 3>}, {transform_indices = @transform_6, window_bounds = array<i64: 1, 384>}]} {
    %c0 = arith.constant 0 : index
    %0 = memref.load %arg1[%c0] : memref<4xf32, #tpu.memory_space<smem>>
    %c1 = arith.constant 1 : index
    %1 = memref.load %arg1[%c1] : memref<4xf32, #tpu.memory_space<smem>>
    %c2 = arith.constant 2 : index
    %2 = memref.load %arg1[%c2] : memref<4xf32, #tpu.memory_space<smem>>
    %c3 = arith.constant 3 : index
    %3 = memref.load %arg1[%c3] : memref<4xf32, #tpu.memory_space<smem>>
    %c0_0 = arith.constant 0 : index
    %c0_1 = arith.constant 0 : index
    %4 = vector.load %arg2[%c0_0, %c0_1] : memref<9x384xf32, #tpu.memory_space<vmem>>, vector<9x384xf32>
    %5 = vector.extract_strided_slice %4 {offsets = [0, 0], sizes = [8, 384], strides = [1, 1]} : vector<9x384xf32> to vector<8x384xf32>
    %c0_2 = arith.constant 0 : index
    %c0_3 = arith.constant 0 : index
    %6 = vector.load %arg3[%c0_2, %c0_3] : memref<16x9xf32, #tpu.memory_space<vmem>>, vector<16x9xf32>
    %cst = arith.constant dense<0.000000e+00> : vector<16x384xf32>
    %7 = tpu.matmul %6, %4, %cst {dimension_numbers = #tpu.dot_dimension_numbers<[1], [0], [0], [1], [0, 0, 1, 1], [], []>} : vector<16x9xf32>, vector<9x384xf32>, vector<16x384xf32> -> vector<16x384xf32>
    %8 = arith.mulf %5, %5 : vector<8x384xf32>
    %cst_4 = arith.constant dense<0.000000e+00> : vector<384xf32>
    %9 = vector.multi_reduction <add>, %8, %cst_4 [0] : vector<8x384xf32> to vector<384xf32>
    %10 = vector.shape_cast %9 : vector<384xf32> to vector<1x384xf32>
    %11 = vector.broadcast %10 : vector<1x384xf32> to vector<16x384xf32>
    %12 = arith.addf %7, %11 : vector<16x384xf32>
    %cst_5 = arith.constant 0.000000e+00 : f32
    %13 = vector.broadcast %cst_5 : f32 to vector<16x384xf32>
    %14 = arith.maximumf %12, %13 : vector<16x384xf32>
    %15 = vector.broadcast %0 : f32 to vector<16x384xf32>
    %16 = arith.mulf %15, %14 : vector<16x384xf32>
    %17 = math.exp %16 : vector<16x384xf32>
    %18 = vector.broadcast %1 : f32 to vector<16x384xf32>
    %19 = arith.mulf %18, %17 : vector<16x384xf32>
    %c0_6 = arith.constant 0 : index
    %c0_7 = arith.constant 0 : index
    %20 = vector.load %arg4[%c0_6, %c0_7] : memref<24x16xf32, #tpu.memory_space<vmem>>, vector<24x16xf32>
    %cst_8 = arith.constant dense<0.000000e+00> : vector<24x384xf32>
    %21 = tpu.matmul %20, %19, %cst_8 {dimension_numbers = #tpu.dot_dimension_numbers<[1], [0], [0], [1], [0, 0, 1, 1], [], []>} : vector<24x16xf32>, vector<16x384xf32>, vector<24x384xf32> -> vector<24x384xf32>
    %22 = vector.extract_strided_slice %21 {offsets = [0, 0], sizes = [8, 384], strides = [1, 1]} : vector<24x384xf32> to vector<8x384xf32>
    %23 = vector.extract_strided_slice %21 {offsets = [8, 0], sizes = [16, 384], strides = [1, 1]} : vector<24x384xf32> to vector<16x384xf32>
    %24 = arith.mulf %23, %19 : vector<16x384xf32>
    %cst_9 = arith.constant dense<0.000000e+00> : vector<384xf32>
    %25 = vector.multi_reduction <add>, %24, %cst_9 [0] : vector<16x384xf32> to vector<384xf32>
    %26 = vector.shape_cast %25 : vector<384xf32> to vector<1x384xf32>
    %27 = vector.broadcast %2 : f32 to vector<1x384xf32>
    %28 = arith.subf %27, %26 : vector<1x384xf32>
    %cst_10 = arith.constant 9.99999997E-7 : f32
    %29 = vector.broadcast %cst_10 : f32 to vector<1x384xf32>
    %30 = arith.maximumf %28, %29 : vector<1x384xf32>
    %c0_11 = arith.constant 0 : index
    %c0_12 = arith.constant 0 : index
    %31 = vector.load %arg6[%c0_11, %c0_12] : memref<8x3xf32, #tpu.memory_space<vmem>>, vector<8x3xf32>
    %32 = vector.extract_strided_slice %31 {offsets = [0, 0], sizes = [8, 1], strides = [1, 1]} : vector<8x3xf32> to vector<8x1xf32>
    %33 = vector.extract_strided_slice %31 {offsets = [0, 1], sizes = [8, 1], strides = [1, 1]} : vector<8x3xf32> to vector<8x1xf32>
    %34 = vector.extract_strided_slice %31 {offsets = [0, 2], sizes = [8, 1], strides = [1, 1]} : vector<8x3xf32> to vector<8x1xf32>
    %35 = arith.mulf %30, %30 : vector<1x384xf32>
    %36 = vector.broadcast %33 : vector<8x1xf32> to vector<8x384xf32>
    %37 = vector.broadcast %35 : vector<1x384xf32> to vector<8x384xf32>
    %38 = arith.addf %36, %37 : vector<8x384xf32>
    %39 = vector.broadcast %32 : vector<8x1xf32> to vector<8x384xf32>
    %40 = arith.subf %22, %39 : vector<8x384xf32>
    %41 = math.rsqrt %38 : vector<8x384xf32>
    %42 = arith.mulf %40, %41 : vector<8x384xf32>
    %cst_13 = arith.constant -5.000000e-01 : f32
    %43 = vector.broadcast %cst_13 : f32 to vector<8x1xf32>
    %44 = arith.mulf %34, %43 : vector<8x1xf32>
    %45 = arith.mulf %42, %42 : vector<8x384xf32>
    %46 = math.log %38 : vector<8x384xf32>
    %47 = arith.addf %45, %46 : vector<8x384xf32>
    %48 = vector.broadcast %44 : vector<8x1xf32> to vector<8x384xf32>
    %49 = arith.mulf %48, %47 : vector<8x384xf32>
    %cst_14 = arith.constant dense<0.000000e+00> : vector<384xf32>
    %50 = vector.multi_reduction <add>, %49, %cst_14 [0] : vector<8x384xf32> to vector<384xf32>
    %51 = vector.shape_cast %50 : vector<384xf32> to vector<1x384xf32>
    %c0_15 = arith.constant 0 : index
    %c0_16 = arith.constant 0 : index
    %52 = vector.load %arg5[%c0_15, %c0_16] : memref<8x2xf32, #tpu.memory_space<vmem>>, vector<8x2xf32>
    %53 = vector.extract_strided_slice %52 {offsets = [0, 0], sizes = [8, 1], strides = [1, 1]} : vector<8x2xf32> to vector<8x1xf32>
    %54 = vector.extract_strided_slice %52 {offsets = [0, 1], sizes = [8, 1], strides = [1, 1]} : vector<8x2xf32> to vector<8x1xf32>
    %55 = vector.broadcast %53 : vector<8x1xf32> to vector<8x384xf32>
    %56 = arith.subf %5, %55 : vector<8x384xf32>
    %57 = vector.broadcast %54 : vector<8x1xf32> to vector<8x384xf32>
    %58 = arith.mulf %56, %57 : vector<8x384xf32>
    %59 = arith.mulf %58, %58 : vector<8x384xf32>
    %cst_17 = arith.constant dense<0.000000e+00> : vector<384xf32>
    %60 = vector.multi_reduction <add>, %59, %cst_17 [0] : vector<8x384xf32> to vector<384xf32>
    %61 = vector.shape_cast %60 : vector<384xf32> to vector<1x384xf32>
    %cst_18 = arith.constant -5.000000e-01 : f32
    %62 = vector.broadcast %cst_18 : f32 to vector<1x384xf32>
    %63 = arith.mulf %62, %61 : vector<1x384xf32>
    %64 = arith.addf %63, %51 : vector<1x384xf32>
    %65 = vector.broadcast %3 : f32 to vector<1x384xf32>
    %66 = arith.addf %64, %65 : vector<1x384xf32>
    %cst_19 = arith.constant 0.000000e+00 : f32
    %67 = vector.broadcast %cst_19 : f32 to vector<1x384xf32>
    %68 = arith.subf %67, %66 : vector<1x384xf32>
    %c0_20 = arith.constant 0 : index
    %c0_21 = arith.constant 0 : index
    %69 = vector.load %arg7[%c0_20, %c0_21] : memref<1x384xf32, #tpu.memory_space<vmem>>, vector<1x384xf32>
    tpu.vector_store %arg7[%c0_20, %c0_21], %68 {strides = array<i32>} : memref<1x384xf32, #tpu.memory_space<vmem>>, vector<1x384xf32>,
    return
  }
  func.func @transform_0(%arg0: i32) -> i32 {
    %c0_i32 = arith.constant 0 : i32
    %c0_i32_0 = arith.constant 0 : i32
    return %c0_i32 : i32
  }
  func.func @transform_1(%arg0: i32) -> (i32, i32) {
    %c0_i32 = arith.constant 0 : i32
    %c0_i32_0 = arith.constant 0 : i32
    return %c0_i32, %arg0 : i32, i32
  }
  func.func @transform_2(%arg0: i32) -> (i32, i32) {
    %c0_i32 = arith.constant 0 : i32
    %c0_i32_0 = arith.constant 0 : i32
    %c0_i32_1 = arith.constant 0 : i32
    return %c0_i32, %c0_i32_0 : i32, i32
  }
  func.func @transform_3(%arg0: i32) -> (i32, i32) {
    %c0_i32 = arith.constant 0 : i32
    %c0_i32_0 = arith.constant 0 : i32
    %c0_i32_1 = arith.constant 0 : i32
    return %c0_i32, %c0_i32_0 : i32, i32
  }
  func.func @transform_4(%arg0: i32) -> (i32, i32) {
    %c0_i32 = arith.constant 0 : i32
    %c0_i32_0 = arith.constant 0 : i32
    %c0_i32_1 = arith.constant 0 : i32
    return %c0_i32, %c0_i32_0 : i32, i32
  }
  func.func @transform_5(%arg0: i32) -> (i32, i32) {
    %c0_i32 = arith.constant 0 : i32
    %c0_i32_0 = arith.constant 0 : i32
    %c0_i32_1 = arith.constant 0 : i32
    return %c0_i32, %c0_i32_0 : i32, i32
  }
  func.func @transform_6(%arg0: i32) -> (i32, i32) {
    %c0_i32 = arith.constant 0 : i32
    %c0_i32_0 = arith.constant 0 : i32
    return %c0_i32, %arg0 : i32, i32
  }
}

</mosaic_0001>

<llo_original>
// kernel: objective.1
$region0: #{objective.1}
  #allocation0 [shape = 'u32[]', space=smem, size = 0x4, offset = 0x4, fixed_abs, tag = 'smem constant byte address 0x4 - core index']
  #allocation1 [shape = 'u32[144,128]{1,0:T(1,128)}', space=vmem, size = 0x12000, scoped, tag = 'internal scratch']
  %s0 = inlined_call_operand.vmem [shape: f32[4], index: 0, kind: input, shape index: {}]
  %s1 = inlined_call_operand.vmem [shape: f32[9,384], index: 1, kind: input, shape index: {}]
  %s2 = inlined_call_operand.vmem [shape: f32[16,9], index: 2, kind: input, shape index: {}]
  %s3 = inlined_call_operand.vmem [shape: f32[24,16], index: 3, kind: input, shape index: {}]
  %s4 = inlined_call_operand.vmem [shape: f32[8,2], index: 4, kind: input, shape index: {}]
  %s5 = inlined_call_operand.vmem [shape: f32[8,3], index: 5, kind: input, shape index: {}]
  %s6 = inlined_call_operand.vmem [shape: f32[1,384], index: 6, kind: output, shape index: {}]
  %s7 = sld [smem:[#allocation0]]
  $region38: #{objective.1} parent=0
    _
  %s9 = ssub.s32 1, %s7
  %s10 = scalar_select 0, %s9, %s7
  $region1: #{objective.1} parent=0
    #allocation2 [shape = 'u8[512]{0}', space=smem, size = 0x200, scoped, tag = 'input window, operand 0, single buffered']
    #allocation3 [shape = 's32[1]{0}', space=sflag, size = 0x4, scoped, tag = 'scoped memory for objective.1']
    %11 = vsyncpa [#allocation3], 0
    // Predicated region
    $region2: #{objective.1} parent=1 // pred_check
      _
    $region3: #{objective.1} parent=1 // pred_check_branch
      %13 = sbr.rel (0) target = $region5
    $region4: #{objective.1} parent=1 // pred_region
      %s15 = ssub.s32 16, 16
      %16 = vsyncadd [#allocation3], %s15
      %s18 = sshll.u32 %s0, 4
      %s19 = int_to_ptr.vmem [resolvable:$true] %s18
      %21 = dma.vmem_to_smem %s19, 16, [#allocation2], [#allocation3]
    $region5: #{objective.1} parent=1 // pred_fallthru
      _
    // Predicated region
    $region6: #{objective.1} parent=1 // pred_check
      _
    $region7: #{objective.1} parent=1 // pred_check_branch
      %23 = sbr.rel (0) target = $region9
    $region8: #{objective.1} parent=1 // pred_region
      _
    $region9: #{objective.1} parent=1 // pred_fallthru
      _
    // Predicated region
    $region10: #{objective.1} parent=1 // pred_check
      _
    $region11: #{objective.1} parent=1 // pred_check_branch
      %25 = sbr.rel (0) target = $region13
    $region12: #{objective.1} parent=1 // pred_region
      _
    $region13: #{objective.1} parent=1 // pred_fallthru
      _
    // Predicated region
    $region14: #{objective.1} parent=1 // pred_check
      _
    $region15: #{objective.1} parent=1 // pred_check_branch
      %27 = sbr.rel (0) target = $region17
    $region16: #{objective.1} parent=1 // pred_region
      _
    $region17: #{objective.1} parent=1 // pred_fallthru
      _
    // Predicated region
    $region18: #{objective.1} parent=1 // pred_check
      _
    $region19: #{objective.1} parent=1 // pred_check_branch
      %29 = sbr.rel (0) target = $region21
    $region20: #{objective.1} parent=1 // pred_region
      _
    $region21: #{objective.1} parent=1 // pred_fallthru
      _
    // Predicated region
    $region22: #{objective.1} parent=1 // pred_check
      _
    $region23: #{objective.1} parent=1 // pred_check_branch
      %31 = sbr.rel (0) target = $region25
    $region24: #{objective.1} parent=1 // pred_region
      _
    $region25: #{objective.1} parent=1 // pred_fallthru
      _
    // Predicated region
    $region26: #{objective.1} parent=1 // pred_check
      _
    $region27: #{objective.1} parent=1 // pred_check_branch
      %33 = sbr.rel (0) target = $region29
    $region28: #{objective.1} parent=1 // pred_region
      %34 = dma.done [#allocation3], 16
    $region29: #{objective.1} parent=1 // pred_fallthru
      _
    %35 = sfence
    %s36 = sld [smem:[#allocation2]]
    %s37 = sld [smem:[#allocation2 + $0x1]]
    %s38 = sld [smem:[#allocation2 + $0x2]]
    %s39 = sld [smem:[#allocation2 + $0x3]]
    %v40 = vld [vmem:[%s1] sm:$0xff]
    %v41 = vld [vmem:[%s1 + $0x8] sm:$0xff]
    %v42 = vld [vmem:[%s1 + $0x10] sm:$0xff]
    %v43 = vld [vmem:[%s1 + $0x18] sm:$0x1]
    %v44 = vld [vmem:[%s1 + $0x20] sm:$0x1]
    %v45 = vld [vmem:[%s1 + $0x28] sm:$0x1]
    %v46 = vld [vmem:[%s2] sm:$0xff]
    %v47 = vld [vmem:[%s2 + $0x8] sm:$0xff]
    %v48 = vmul.f32 %v40, %v40
    %v49 = vmul.f32 %v41, %v41
    %v50 = vmul.f32 %v42, %v42
    %v51 = vrot.slane %v48, 4
    %v52 = vadd.f32 %v48, %v51
    %v53 = vrot.slane %v52, 2
    %v54 = vadd.f32 %v52, %v53
    %v55 = vrot.slane %v54, 1
    %v56 = vadd.f32 %v54, %v55
    %v57 = vrot.slane %v49, 4
    %v58 = vadd.f32 %v49, %v57
    %v59 = vrot.slane %v58, 2
    %v60 = vadd.f32 %v58, %v59
    %v61 = vrot.slane %v60, 1
    %v62 = vadd.f32 %v60, %v61
    %v63 = vrot.slane %v50, 4
    %v64 = vadd.f32 %v50, %v63
    %v65 = vrot.slane %v64, 2
    %v66 = vadd.f32 %v64, %v65
    %v67 = vrot.slane %v66, 1
    %v68 = vadd.f32 %v66, %v67
    %vm69 = vcmask 72704
    %v71 = vsel %vm69, %v46, 0
    %v74 = vsel %vm69, %v47, 0
    %vm76 = vcmask 1040384
    %v78 = vsel %vm76, %v43, 0
    %v81 = vsel %vm76, %v44, 0
    %v84 = vsel %vm76, %v45, 0
    %86 = vmatprep.subr.mxu0 %v41
    %87 = vmatpush1.msra.mxu0 %v40
    %88 = vmatprep.subr.mxu0 %v81
    %89 = vmatpush1.msra.mxu0 %v78
    %90 = vmatprep.subr.mxu0 0.0
    %91 = vmatpush1.msra.mxu0 0.0
    %92 = vmatprep.subr.mxu0 0.0
    %93 = vmatpush1.msra.mxu0 0.0
    %94 = vmatprep.subr.mxu0 0.0
    %95 = vmatpush1.msra.mxu0 0.0
    %96 = vmatprep.subr.mxu0 0.0
    %97 = vmatpush1.msra.mxu0 0.0
    %98 = vmatprep.subr.mxu0 0.0
    %99 = vmatpush1.msra.mxu0 0.0
    %100 = vmatprep.subr.mxu0 0.0
    %101 = vmatpush1.msra.mxu0 0.0
    %102 = vmatprep.subr.mxu0 0.0
    %103 = vmatpush1.msra.mxu0 0.0
    %104 = vmatprep.subr.mxu0 0.0
    %105 = vmatpush1.msra.mxu0 0.0
    %106 = vmatprep.subr.mxu0 0.0
    %107 = vmatpush1.msra.mxu0 0.0
    %108 = vmatprep.subr.mxu0 0.0
    %109 = vmatpush1.msra.mxu0 0.0
    %110 = vmatprep.subr.mxu0 0.0
    %111 = vmatpush1.msra.mxu0 0.0
    %112 = vmatprep.subr.mxu0 0.0
    %113 = vmatpush1.msra.mxu0 0.0
    %114 = vmatprep.subr.mxu0 0.0
    %115 = vmatpush1.msra.mxu0 0.0
    %116 = vmatprep.subr.mxu0 0.0
    %117 = vmatpush1.msra.mxu0 0.0
    %118 = vmatprep.subr.mxu0 0.0
    %119 = vmatpush1.msra.mxu0 0.0
    %120 = vmatprep.subr.mxu0 0.0
    %121 = vmatpush1.msra.mxu0 0.0
    %122 = vmatprep.subr.mxu0 0.0
    %123 = vmatpush1.msra.mxu0 0.0
    %124 = vmatprep.subr.mxu0 0.0
    %125 = vmatpush1.msra.mxu0 0.0
    %126 = vmatprep.subr.mxu0 0.0
    %127 = vmatpush1.msra.mxu0 0.0
    %128 = vmatprep.subr.mxu0 0.0
    %129 = vmatpush1.msra.mxu0 0.0
    %130 = vmatprep.subr.mxu0 0.0
    %131 = vmatpush1.msra.mxu0 0.0
    %132 = vmatprep.subr.mxu0 0.0
    %133 = vmatpush1.msra.mxu0 0.0
    %134 = vmatprep.subr.mxu0 0.0
    %135 = vmatpush1.msra.mxu0 0.0
    %136 = vmatprep.subr.mxu0 0.0
    %137 = vmatpush1.msra.mxu0 0.0
    %138 = vmatprep.subr.mxu0 0.0
    %139 = vmatpush1.msra.mxu0 0.0
    %140 = vmatprep.subr.mxu0 0.0
    %141 = vmatpush1.msra.mxu0 0.0
    %142 = vmatprep.subr.mxu0 0.0
    %143 = vmatpush1.msra.mxu0 0.0
    %144 = vmatprep.subr.mxu0 0.0
    %145 = vmatpush1.msra.mxu0 0.0
    %146 = vmatprep.subr.mxu0 0.0
    %147 = vmatpush1.msra.mxu0 0.0
    %148 = vmatprep.subr.mxu0 0.0
    %149 = vmatpush1.msra.mxu0 0.0
    %150 = vmatprep.mubr.f32.mxu0 0.0
    %151 = vmatmul.mubr.f32.gmra.mrb[0].mxu0 %v71
    %v152 = vpop.f32.mrb[0].mxu0
    %v153 = vadd.f32 %v56, %v152
    %v154 = vpop.f32.mrb[0].mxu0
    %v155 = vadd.f32 %v62, %v154
    %156 = vmatprep.mubr.f32.mxu0 0.0
    %157 = vmatmul.mubr.f32.gmra.mrb[0].mxu0 %v74
    %v158 = vpop.f32.mrb[0].mxu0
    %v159 = vadd.f32 %v56, %v158
    %v160 = vpop.f32.mrb[0].mxu0
    %v161 = vadd.f32 %v62, %v160
    %162 = vdwg.mxu0
    %163 = vmatprep.subr.mxu0 0.0
    %164 = vmatpush1.msra.mxu0 %v42
    %165 = vmatprep.subr.mxu0 0.0
    %166 = vmatpush1.msra.mxu0 %v84
    %167 = vmatprep.subr.mxu0 0.0
    %168 = vmatpush1.msra.mxu0 0.0
    %169 = vmatprep.subr.mxu0 0.0
    %170 = vmatpush1.msra.mxu0 0.0
    %171 = vmatprep.subr.mxu0 0.0
    %172 = vmatpush1.msra.mxu0 0.0
    %173 = vmatprep.subr.mxu0 0.0
    %174 = vmatpush1.msra.mxu0 0.0
    %175 = vmatprep.subr.mxu0 0.0
    %176 = vmatpush1.msra.mxu0 0.0
    %177 = vmatprep.subr.mxu0 0.0
    %178 = vmatpush1.msra.mxu0 0.0
    %179 = vmatprep.subr.mxu0 0.0
    %180 = vmatpush1.msra.mxu0 0.0
    %181 = vmatprep.subr.mxu0 0.0
    %182 = vmatpush1.msra.mxu0 0.0
    %183 = vmatprep.subr.mxu0 0.0
    %184 = vmatpush1.msra.mxu0 0.0
    %185 = vmatprep.subr.mxu0 0.0
    %186 = vmatpush1.msra.mxu0 0.0
    %187 = vmatprep.subr.mxu0 0.0
    %188 = vmatpush1.msra.mxu0 0.0
    %189 = vmatprep.subr.mxu0 0.0
    %190 = vmatpush1.msra.mxu0 0.0
    %191 = vmatprep.subr.mxu0 0.0
    %192 = vmatpush1.msra.mxu0 0.0
    %193 = vmatprep.subr.mxu0 0.0
    %194 = vmatpush1.msra.mxu0 0.0
    %195 = vmatprep.subr.mxu0 0.0
    %196 = vmatpush1.msra.mxu0 0.0
    %197 = vmatprep.subr.mxu0 0.0
    %198 = vmatpush1.msra.mxu0 0.0
    %199 = vmatprep.subr.mxu0 0.0
    %200 = vmatpush1.msra.mxu0 0.0
    %201 = vmatprep.subr.mxu0 0.0
    %202 = vmatpush1.msra.mxu0 0.0
    %203 = vmatprep.subr.mxu0 0.0
    %204 = vmatpush1.msra.mxu0 0.0
    %205 = vmatprep.subr.mxu0 0.0
    %206 = vmatpush1.msra.mxu0 0.0
    %207 = vmatprep.subr.mxu0 0.0
    %208 = vmatpush1.msra.mxu0 0.0
    %209 = vmatprep.subr.mxu0 0.0
    %210 = vmatpush1.msra.mxu0 0.0
    %211 = vmatprep.subr.mxu0 0.0
    %212 = vmatpush1.msra.mxu0 0.0
    %213 = vmatprep.subr.mxu0 0.0
    %214 = vmatpush1.msra.mxu0 0.0
    %215 = vmatprep.subr.mxu0 0.0
    %216 = vmatpush1.msra.mxu0 0.0
    %217 = vmatprep.subr.mxu0 0.0
    %218 = vmatpush1.msra.mxu0 0.0
    %219 = vmatprep.subr.mxu0 0.0
    %220 = vmatpush1.msra.mxu0 0.0
    %221 = vmatprep.subr.mxu0 0.0
    %222 = vmatpush1.msra.mxu0 0.0
    %223 = vmatprep.subr.mxu0 0.0
    %224 = vmatpush1.msra.mxu0 0.0
    %225 = vmatprep.subr.mxu0 0.0
    %226 = vmatpush1.msra.mxu0 0.0
    %227 = vmatprep.mubr.f32.mxu0 0.0
    %228 = vmatmul.mubr.f32.gmra.mrb[0].mxu0 %v71
    %v229 = vpop.f32.mrb[0].mxu0
    %v230 = vadd.f32 %v68, %v229
    %v231 = vpop.f32.mrb[0].mxu0
    %232 = vmatprep.mubr.f32.mxu0 0.0
    %233 = vmatmul.mubr.f32.gmra.mrb[0].mxu0 %v74
    %v234 = vpop.f32.mrb[0].mxu0
    %v235 = vadd.f32 %v68, %v234
    %v236 = vpop.f32.mrb[0].mxu0
    %237 = vdwg.mxu0
    %v238 = vmax.f32 %v153, 0.0
    %v239 = vmax.f32 %v155, 0.0
    %v240 = vmax.f32 %v230, 0.0
    %v241 = vmax.f32 %v159, 0.0
    %v242 = vmax.f32 %v161, 0.0
    %v243 = vmax.f32 %v235, 0.0
    %v244 = vstv %s36
    %v245 = vmul.f32 %v244, %v238
    %v246 = vmul.f32 %v244, %v239
    %v247 = vmul.f32 %v244, %v240
    %v248 = vmul.f32 %v244, %v241
    %v249 = vmul.f32 %v244, %v242
    %v250 = vmul.f32 %v244, %v243
    %v251 = vmul.f32 %v245, 1.442695
    %v252 = vpow.pop %v251
    %v253 = vmul.f32 %v246, 1.442695
    %v254 = vpow.pop %v253
    %v255 = vmul.f32 %v247, 1.442695
    %v256 = vpow.pop %v255
    %v257 = vmul.f32 %v248, 1.442695
    %v258 = vpow.pop %v257
    %v259 = vmul.f32 %v249, 1.442695
    %v260 = vpow.pop %v259
    %v261 = vmul.f32 %v250, 1.442695
    %v262 = vpow.pop %v261
    %v263 = vstv %s37
    %v264 = vmul.f32 %v263, %v252
    %v265 = vmul.f32 %v263, %v254
    %v266 = vmul.f32 %v263, %v256
    %v267 = vmul.f32 %v263, %v258
    %v268 = vmul.f32 %v263, %v260
    %v269 = vmul.f32 %v263, %v262
    %v270 = vld [vmem:[%s3] sm:$0xff]
    %v271 = vld [vmem:[%s3 + $0x8] sm:$0xff]
    %v272 = vld [vmem:[%s3 + $0x10] sm:$0xff]
    %vm273 = vcmask 130048
    %v275 = vsel %vm273, %v270, 0
    %v278 = vsel %vm273, %v271, 0
    %v281 = vsel %vm273, %v272, 0
    %283 = vmatprep.subr.mxu0 %v265
    %284 = vmatpush1.msra.mxu0 %v264
    %285 = vmatprep.subr.mxu0 %v268
    %286 = vmatpush1.msra.mxu0 %v267
    %287 = vmatprep.subr.mxu0 0.0
    %288 = vmatpush1.msra.mxu0 0.0
    %289 = vmatprep.subr.mxu0 0.0
    %290 = vmatpush1.msra.mxu0 0.0
    %291 = vmatprep.subr.mxu0 0.0
    %292 = vmatpush1.msra.mxu0 0.0
    %293 = vmatprep.subr.mxu0 0.0
    %294 = vmatpush1.msra.mxu0 0.0
    %295 = vmatprep.subr.mxu0 0.0
    %296 = vmatpush1.msra.mxu0 0.0
    %297 = vmatprep.subr.mxu0 0.0
    %298 = vmatpush1.msra.mxu0 0.0
    %299 = vmatprep.subr.mxu0 0.0
    %300 = vmatpush1.msra.mxu0 0.0
    %301 = vmatprep.subr.mxu0 0.0
    %302 = vmatpush1.msra.mxu0 0.0
    %303 = vmatprep.subr.mxu0 0.0
    %304 = vmatpush1.msra.mxu0 0.0
    %305 = vmatprep.subr.mxu0 0.0
    %306 = vmatpush1.msra.mxu0 0.0
    %307 = vmatprep.subr.mxu0 0.0
    %308 = vmatpush1.msra.mxu0 0.0
    %309 = vmatprep.subr.mxu0 0.0
    %310 = vmatpush1.msra.mxu0 0.0
    %311 = vmatprep.subr.mxu0 0.0
    %312 = vmatpush1.msra.mxu0 0.0
    %313 = vmatprep.subr.mxu0 0.0
    %314 = vmatpush1.msra.mxu0 0.0
    %315 = vmatprep.subr.mxu0 0.0
    %316 = vmatpush1.msra.mxu0 0.0
    %317 = vmatprep.subr.mxu0 0.0
    %318 = vmatpush1.msra.mxu0 0.0
    %319 = vmatprep.subr.mxu0 0.0
    %320 = vmatpush1.msra.mxu0 0.0
    %321 = vmatprep.subr.mxu0 0.0
    %322 = vmatpush1.msra.mxu0 0.0
    %323 = vmatprep.subr.mxu0 0.0
    %324 = vmatpush1.msra.mxu0 0.0
    %325 = vmatprep.subr.mxu0 0.0
    %326 = vmatpush1.msra.mxu0 0.0
    %327 = vmatprep.subr.mxu0 0.0
    %328 = vmatpush1.msra.mxu0 0.0
    %329 = vmatprep.subr.mxu0 0.0
    %330 = vmatpush1.msra.mxu0 0.0
    %331 = vmatprep.subr.mxu0 0.0
    %332 = vmatpush1.msra.mxu0 0.0
    %333 = vmatprep.subr.mxu0 0.0
    %334 = vmatpush1.msra.mxu0 0.0
    %335 = vmatprep.subr.mxu0 0.0
    %336 = vmatpush1.msra.mxu0 0.0
    %337 = vmatprep.subr.mxu0 0.0
    %338 = vmatpush1.msra.mxu0 0.0
    %339 = vmatprep.subr.mxu0 0.0
    %340 = vmatpush1.msra.mxu0 0.0
    %341 = vmatprep.subr.mxu0 0.0
    %342 = vmatpush1.msra.mxu0 0.0
    %343 = vmatprep.subr.mxu0 0.0
    %344 = vmatpush1.msra.mxu0 0.0
    %345 = vmatprep.subr.mxu0 0.0
    %346 = vmatpush1.msra.mxu0 0.0
    %347 = vmatprep.mubr.f32.mxu0 0.0
    %348 = vmatmul.mubr.f32.gmra.mrb[0].mxu0 %v275
    %v349 = vpop.f32.mrb[0].mxu0
    %v350 = vadd.f32 0.0, %v349
    %v351 = vpop.f32.mrb[0].mxu0
    %v352 = vadd.f32 0.0, %v351
    %353 = vmatprep.mubr.f32.mxu0 0.0
    %354 = vmatmul.mubr.f32.gmra.mrb[0].mxu0 %v278
    %v355 = vpop.f32.mrb[0].mxu0
    %v356 = vadd.f32 0.0, %v355
    %v357 = vpop.f32.mrb[0].mxu0
    %v358 = vadd.f32 0.0, %v357
    %359 = vmatprep.mubr.f32.mxu0 0.0
    %360 = vmatmul.mubr.f32.gmra.mrb[0].mxu0 %v281
    %v361 = vpop.f32.mrb[0].mxu0
    %v362 = vadd.f32 0.0, %v361
    %v363 = vpop.f32.mrb[0].mxu0
    %v364 = vadd.f32 0.0, %v363
    %365 = vdwg.mxu0
    %366 = vmatprep.subr.mxu0 0.0
    %367 = vmatpush1.msra.mxu0 %v266
    %368 = vmatprep.subr.mxu0 0.0
    %369 = vmatpush1.msra.mxu0 %v269
    %370 = vmatprep.subr.mxu0 0.0
    %371 = vmatpush1.msra.mxu0 0.0
    %372 = vmatprep.subr.mxu0 0.0
    %373 = vmatpush1.msra.mxu0 0.0
    %374 = vmatprep.subr.mxu0 0.0
    %375 = vmatpush1.msra.mxu0 0.0
    %376 = vmatprep.subr.mxu0 0.0
    %377 = vmatpush1.msra.mxu0 0.0
    %378 = vmatprep.subr.mxu0 0.0
    %379 = vmatpush1.msra.mxu0 0.0
    %380 = vmatprep.subr.mxu0 0.0
    %381 = vmatpush1.msra.mxu0 0.0
    %382 = vmatprep.subr.mxu0 0.0
    %383 = vmatpush1.msra.mxu0 0.0
    %384 = vmatprep.subr.mxu0 0.0
    %385 = vmatpush1.msra.mxu0 0.0
    %386 = vmatprep.subr.mxu0 0.0
    %387 = vmatpush1.msra.mxu0 0.0
    %388 = vmatprep.subr.mxu0 0.0
    %389 = vmatpush1.msra.mxu0 0.0
    %390 = vmatprep.subr.mxu0 0.0
    %391 = vmatpush1.msra.mxu0 0.0
    %392 = vmatprep.subr.mxu0 0.0
    %393 = vmatpush1.msra.mxu0 0.0
    %394 = vmatprep.subr.mxu0 0.0
    %395 = vmatpush1.msra.mxu0 0.0
    %396 = vmatprep.subr.mxu0 0.0
    %397 = vmatpush1.msra.mxu0 0.0
    %398 = vmatprep.subr.mxu0 0.0
    %399 = vmatpush1.msra.mxu0 0.0
    %400 = vmatprep.subr.mxu0 0.0
    %401 = vmatpush1.msra.mxu0 0.0
    %402 = vmatprep.subr.mxu0 0.0
    %403 = vmatpush1.msra.mxu0 0.0
    %404 = vmatprep.subr.mxu0 0.0
    %405 = vmatpush1.msra.mxu0 0.0
    %406 = vmatprep.subr.mxu0 0.0
    %407 = vmatpush1.msra.mxu0 0.0
    %408 = vmatprep.subr.mxu0 0.0
    %409 = vmatpush1.msra.mxu0 0.0
    %410 = vmatprep.subr.mxu0 0.0
    %411 = vmatpush1.msra.mxu0 0.0
    %412 = vmatprep.subr.mxu0 0.0
    %413 = vmatpush1.msra.mxu0 0.0
    %414 = vmatprep.subr.mxu0 0.0
    %415 = vmatpush1.msra.mxu0 0.0
    %416 = vmatprep.subr.mxu0 0.0
    %417 = vmatpush1.msra.mxu0 0.0
    %418 = vmatprep.subr.mxu0 0.0
    %419 = vmatpush1.msra.mxu0 0.0
    %420 = vmatprep.subr.mxu0 0.0
    %421 = vmatpush1.msra.mxu0 0.0
    %422 = vmatprep.subr.mxu0 0.0
    %423 = vmatpush1.msra.mxu0 0.0
    %424 = vmatprep.subr.mxu0 0.0
    %425 = vmatpush1.msra.mxu0 0.0
    %426 = vmatprep.subr.mxu0 0.0
    %427 = vmatpush1.msra.mxu0 0.0
    %428 = vmatprep.subr.mxu0 0.0
    %429 = vmatpush1.msra.mxu0 0.0
    %430 = vmatprep.mubr.f32.mxu0 0.0
    %431 = vmatmul.mubr.f32.gmra.mrb[0].mxu0 %v275
    %v432 = vpop.f32.mrb[0].mxu0
    %v433 = vadd.f32 0.0, %v432
    %v434 = vpop.f32.mrb[0].mxu0
    %435 = vmatprep.mubr.f32.mxu0 0.0
    %436 = vmatmul.mubr.f32.gmra.mrb[0].mxu0 %v278
    %v437 = vpop.f32.mrb[0].mxu0
    %v438 = vadd.f32 0.0, %v437
    %v439 = vpop.f32.mrb[0].mxu0
    %440 = vmatprep.mubr.f32.mxu0 0.0
    %441 = vmatmul.mubr.f32.gmra.mrb[0].mxu0 %v281
    %v442 = vpop.f32.mrb[0].mxu0
    %v443 = vadd.f32 0.0, %v442
    %v444 = vpop.f32.mrb[0].mxu0
    %445 = vdwg.mxu0
    %v446 = vmul.f32 %v356, %v264
    %v447 = vmul.f32 %v358, %v265
    %v448 = vmul.f32 %v438, %v266
    %v449 = vmul.f32 %v362, %v267
    %v450 = vmul.f32 %v364, %v268
    %v451 = vmul.f32 %v443, %v269
    %v452 = vadd.f32 %v446, %v449
    %v453 = vrot.slane %v452, 4
    %v454 = vadd.f32 %v452, %v453
    %v455 = vrot.slane %v454, 2
    %v456 = vadd.f32 %v454, %v455
    %v457 = vrot.slane %v456, 1
    %v458 = vadd.f32 %v456, %v457
    %v459 = vadd.f32 %v447, %v450
    %v460 = vrot.slane %v459, 4
    %v461 = vadd.f32 %v459, %v460
    %v462 = vrot.slane %v461, 2
    %v463 = vadd.f32 %v461, %v462
    %v464 = vrot.slane %v463, 1
    %v465 = vadd.f32 %v463, %v464
    %v466 = vadd.f32 %v448, %v451
    %v467 = vrot.slane %v466, 4
    %v468 = vadd.f32 %v466, %v467
    %v469 = vrot.slane %v468, 2
    %v470 = vadd.f32 %v468, %v469
    %v471 = vrot.slane %v470, 1
    %v472 = vadd.f32 %v470, %v471
    %v473 = vstv %s38
    %v474 = vsub.f32 %v473, %v458
    %v475 = vsub.f32 %v473, %v465
    %v476 = vsub.f32 %v473, %v472
    %v477 = vmax.f32 %v474, 1e-06
    %v478 = vmax.f32 %v475, 1e-06
    %v479 = vmax.f32 %v476, 1e-06
    %v480 = vld [vmem:[%s5] sm:$0xff]
    %v481 = vmul.f32 %v477, %v477
    %v482 = vmul.f32 %v478, %v478
    %v483 = vmul.f32 %v479, %v479
    %485 = vset.pattern.permute.xlu0 1
    %486 = vperm.xlu0 %485, %v480
    %v487 = vpop.permute.xlu0 %486
    %v489 = vadd.f32 %v487, %v481
    %v490 = vadd.f32 %v487, %v482
    %v491 = vadd.f32 %v487, %v483
    %492 = vset.pattern.permute.xlu0 0
    %493 = vperm.xlu0 %492, %v480
    %v494 = vpop.permute.xlu0 %493
    %v496 = vsub.f32 %v350, %v494
    %v497 = vsub.f32 %v352, %v494
    %v498 = vsub.f32 %v433, %v494
    %v499 = vrsqrt.pop %v489
    %v500 = vrsqrt.pop %v490
    %v501 = vrsqrt.pop %v491
    %v502 = vmul.f32 %v496, %v499
    %v503 = vmul.f32 %v497, %v500
    %v504 = vmul.f32 %v498, %v501
    %v505 = vmul.f32 %v480, -0.5
    %v506 = vmul.f32 %v502, %v502
    %v507 = vmul.f32 %v503, %v503
    %v508 = vmul.f32 %v504, %v504
    %v509 = vlog2.pop %v489
    %v510 = vmul.f32 %v509, 0.6931472
    %v511 = vlog2.pop %v490
    %v512 = vmul.f32 %v511, 0.6931472
    %v513 = vlog2.pop %v491
    %v514 = vmul.f32 %v513, 0.6931472
    %v515 = vadd.f32 %v506, %v510
    %v516 = vadd.f32 %v507, %v512
    %v517 = vadd.f32 %v508, %v514
    %519 = vset.pattern.permute.xlu0 2
    %520 = vperm.xlu0 %519, %v505
    %v521 = vpop.permute.xlu0 %520
    %v523 = vmul.f32 %v521, %v515
    %v524 = vmul.f32 %v521, %v516
    %v525 = vmul.f32 %v521, %v517
    %v526 = vrot.slane %v523, 4
    %v527 = vadd.f32 %v523, %v526
    %v528 = vrot.slane %v527, 2
    %v529 = vadd.f32 %v527, %v528
    %v530 = vrot.slane %v529, 1
    %v531 = vadd.f32 %v529, %v530
    %v532 = vrot.slane %v524, 4
    %v533 = vadd.f32 %v524, %v532
    %v534 = vrot.slane %v533, 2
    %v535 = vadd.f32 %v533, %v534
    %v536 = vrot.slane %v535, 1
    %v537 = vadd.f32 %v535, %v536
    %v538 = vrot.slane %v525, 4
    %v539 = vadd.f32 %v525, %v538
    %v540 = vrot.slane %v539, 2
    %v541 = vadd.f32 %v539, %v540
    %v542 = vrot.slane %v541, 1
    %v543 = vadd.f32 %v541, %v542
    %v544 = vld [vmem:[%s4] sm:$0xff]
    %546 = vset.pattern.permute.xlu0 0
    %547 = vperm.xlu0 %546, %v544
    %v548 = vpop.permute.xlu0 %547
    %v550 = vsub.f32 %v40, %v548
    %v551 = vsub.f32 %v41, %v548
    %v552 = vsub.f32 %v42, %v548
    %553 = vset.pattern.permute.xlu0 1
    %554 = vperm.xlu0 %553, %v544
    %v555 = vpop.permute.xlu0 %554
    %v557 = vmul.f32 %v550, %v555
    %v558 = vmul.f32 %v551, %v555
    %v559 = vmul.f32 %v552, %v555
    %v560 = vmul.f32 %v557, %v557
    %v561 = vmul.f32 %v558, %v558
    %v562 = vmul.f32 %v559, %v559
    %v563 = vrot.slane %v560, 4
    %v564 = vadd.f32 %v560, %v563
    %v565 = vrot.slane %v564, 2
    %v566 = vadd.f32 %v564, %v565
    %v567 = vrot.slane %v566, 1
    %v568 = vadd.f32 %v566, %v567
    %v569 = vrot.slane %v561, 4
    %v570 = vadd.f32 %v561, %v569
    %v571 = vrot.slane %v570, 2
    %v572 = vadd.f32 %v570, %v571
    %v573 = vrot.slane %v572, 1
    %v574 = vadd.f32 %v572, %v573
    %v575 = vrot.slane %v562, 4
    %v576 = vadd.f32 %v562, %v575
    %v577 = vrot.slane %v576, 2
    %v578 = vadd.f32 %v576, %v577
    %v579 = vrot.slane %v578, 1
    %v580 = vadd.f32 %v578, %v579
    %v581 = vmul.f32 %v568, -0.5
    %v582 = vmul.f32 %v574, -0.5
    %v583 = vmul.f32 %v580, -0.5
    %v584 = vadd.f32 %v581, %v531
    %v585 = vadd.f32 %v582, %v537
    %v586 = vadd.f32 %v583, %v543
    %v587 = vstv %s39
    %v588 = vadd.f32 %v584, %v587
    %v589 = vadd.f32 %v585, %v587
    %v590 = vadd.f32 %v586, %v587
    %v591 = vsub.f32 0.0, %v588
    %v592 = vsub.f32 0.0, %v589
    %v593 = vsub.f32 0.0, %v590
    %v597 = vcombine.low %v591, %v592
    %v599 = vunpack.c.l.s4 1966171168
    %v600 = vunpack.c.0.s8 %v599
    %v601 = vlaneseq
    %v602 = vshrl.u32 %v601, 7
    %v603 = vsub.s32 %v600, %v602
    %v604 = vrot.slane %v597, %v603
    %v606 = vunpack.c.l.s4 1966171168
    %v607 = vunpack.c.0.s8 %v606
    %v608 = vlaneseq
    %v609 = vshrl.u32 %v608, 7
    %v610 = vsub.s32 %v607, %v609
    %v611 = vrot.slane %v593, %v610
    %v612 = vcombine.low %v604, %v611
    %v614 = vunpack.c.l.s4 1966171168
    %v615 = vunpack.c.0.s8 %v614
    %v616 = vlaneseq
    %v617 = vshrl.u32 %v616, 7
    %v618 = vsub.s32 %v615, %v617
    %v619 = vrot.slane %v612, %v618
    %v621 = vlaneseq
    %vm622 = vcmp.ge.s32.totalorder %v621, 0
    %vm623 = vcmp.lt.s32.totalorder %v621, 384
    %vm624 = vmand %vm622, %vm623
    %625 = vst.msk [vmem:[%s6] sm:$0x7] %vm624, %v619
    // Predicated region
    $region30: #{objective.1} parent=1 // pred_check
      _
    $region31: #{objective.1} parent=1 // pred_check_branch
      %627 = sbr.rel (0) target = $region33
    $region32: #{objective.1} parent=1 // pred_region
      _
    $region33: #{objective.1} parent=1 // pred_fallthru
      _
    // Predicated region
    $region34: #{objective.1} parent=1 // pred_check
      _
    $region35: #{objective.1} parent=1 // pred_check_branch
      %629 = sbr.rel (0) target = $region37
    $region36: #{objective.1} parent=1 // pred_region
      _
    $region37: #{objective.1} parent=1 // pred_fallthru
      _
    %630 = vsyncpa [#allocation3], 1

</llo_original>
